<compile_context>
chip_gen: v5e
topology: v5e:2x2
jax: 0.10.0
libtpu: 0.0.40
codegen_flags: <defaults>
</compile_context>

<pallas_src>
import functools

import jax
import jax.numpy as jnp
import numpy as np
from jax.experimental import pallas as pl
from jax.experimental.pallas import tpu as pltpu


def _edge_compact_kernel(x_ref, w1_ref, b1_ref, w2_ref, b2_ref, o_ref, *, B, H):
    """One block of B images per grid step.

    x_ref : (B*H, 3*W*Cin)   im2row'd input rows (vertical taps folded into lanes)
    w1_ref: (3*W*Cin, W*Cout) banded conv1 weights (width taps + zero-pad folded in)
    b1_ref: (1, W*Cout)       bias tiled across W
    w2_ref: (3*W*Cout, W*Cout)
    b2_ref: (1, W*Cout)
    o_ref : (B*H, W*Cout)     lane-dense output rows
    """
    BH, WCout = o_ref.shape

    # ---- conv1: ONE MXU matmul, K = 3*W*Cin ----
    y1 = jnp.dot(x_ref[...], w1_ref[...], preferred_element_type=jnp.float32)
    y1 = jnp.maximum(y1 + b1_ref[...], 0.0)                       # (BH, WCout) f32

    # ---- conv2 operand: build the +/-1-row-shifted copies from values (no scratch
    #      store/load round trip).  Pad every image with an aligned 8-row zero block on
    #      top and bottom, then take three statically shifted slices; image boundaries
    #      inside the block get their zero rows from the padding, so no masking needed.
    y3 = y1.reshape(B, H, WCout)                                  # per-image rows
    zpad = jnp.zeros((B, 8, WCout), jnp.float32)
    ypad = jnp.concatenate([zpad, y3, zpad], axis=1)              # (B, H+16, WCout)
    down = ypad[:, 7:7 + H, :]                                    # row h -> y1[h-1] (0 at h=0)
    up = ypad[:, 9:9 + H, :]                                      # row h -> y1[h+1] (0 at h=H-1)
    ycat = jnp.concatenate([down, y3, up], axis=-1).reshape(BH, 3 * WCout)

    # ---- conv2: ONE MXU matmul, K = 3*W*Cout ----
    out = jnp.dot(ycat, w2_ref[...], preferred_element_type=jnp.float32) + b2_ref[...]
    o_ref[...] = out.astype(o_ref.dtype)


def _banded_weights(w_hwio, W):
    """(3, 3, Ci, Co) HWIO conv weights -> (3, W*Ci, W*Co) block-Toeplitz matrices.

    banded[dy, ws*Ci + ci, wo*Co + co] = w[dy, ws - wo + 1, ci, co] (0 outside the band),
    which folds both the horizontal taps and the width zero-padding into plain matmuls.
    Built with exact gather+mask ops (no matmul) so no precision is lost.
    """
    _, _, Ci, Co = w_hwio.shape
    ws_g, wo_g = np.meshgrid(np.arange(W), np.arange(W), indexing="ij")
    dx = ws_g - wo_g + 1                                   # (W, W)
    mask = ((dx >= 0) & (dx <= 2)).astype(np.float32)      # (W, W)
    dx_idx = np.clip(dx, 0, 2)                             # (W, W)

    w = w_hwio.astype(jnp.float32)
    # fancy-index the horizontal tap: (3, W, W, Ci, Co) indexed as (dy, ws, wo, ci, co)
    banded = w[:, dx_idx, :, :] * jnp.asarray(mask)[None, :, :, None, None]
    # -> (dy, ws, ci, wo, co) -> (3, W*Ci, W*Co)
    banded = jnp.transpose(banded, (0, 1, 3, 2, 4))
    return banded.reshape(3, W * Ci, W * Co)


def edge_compact_forward(x_nchw, w1_hwio, b1, w2_hwio, b2, *, images_per_step=8):
    """Pallas implementation of EdgeCompactModule.forward.

    x_nchw : (N, Cin, H, W) float32
    w1_hwio: (3, 3, Cin, Cout), b1: (Cout,)
    w2_hwio: (3, 3, Cout, Cout), b2: (Cout,)
    returns (N, Cout, H, W) float32
    """
    N, Cin, H, W = x_nchw.shape
    Cout = b1.shape[0]
    WCin, WCout = W * Cin, W * Cout
    K1, K2 = 3 * WCin, 3 * WCout

    # Images per grid step (M = B*H rows per matmul).  B=8 -> M=128 saturates a v5e MXU
    # pass; for large N the grid has many steps so both v7x TensorCores stay busy.
    B = max(1, min(images_per_step, N))
    NB = -(-N // B) * B                    # pad batch to a multiple of B
    steps = NB // B
    BH = B * H

    # Layout glue (plain JAX): NCHW -> rows (H, W*Cin), then im2row over the vertical tap
    # dy so conv1 is a single matmul with K = 3*W*Cin and no in-kernel row shifts.
    x_rows = jnp.transpose(x_nchw, (0, 2, 3, 1)).reshape(N, H, WCin).astype(jnp.float32)
    x_pad = jnp.pad(x_rows, ((0, 0), (1, 1), (0, 0)))                      # (N, H+2, WCin)
    x_cat = jnp.concatenate(
        [x_pad[:, 0:H], x_pad[:, 1:H + 1], x_pad[:, 2:H + 2]], axis=-1)    # (N, H, 3*WCin)
    if NB != N:
        x_cat = jnp.pad(x_cat, ((0, NB - N), (0, 0), (0, 0)))
    x_flat = x_cat.reshape(NB * H, K1)

    w1b = _banded_weights(w1_hwio, W).reshape(K1, WCout)    # (3*W*Cin,  W*Cout)
    w2b = _banded_weights(w2_hwio, W).reshape(K2, WCout)    # (3*W*Cout, W*Cout)
    b1r = jnp.tile(b1.astype(jnp.float32), W).reshape(1, WCout)
    b2r = jnp.tile(b2.astype(jnp.float32), W).reshape(1, WCout)

    kernel = functools.partial(_edge_compact_kernel, B=B, H=H)
    out_flat = pl.pallas_call(
        kernel,
        out_shape=jax.ShapeDtypeStruct((NB * H, WCout), jnp.float32),
        grid=(steps,),
        in_specs=[
            pl.BlockSpec((BH, K1), lambda i: (i, 0)),
            pl.BlockSpec((K1, WCout), lambda i: (0, 0)),     # resident weights
            pl.BlockSpec((1, WCout), lambda i: (0, 0)),
            pl.BlockSpec((K2, WCout), lambda i: (0, 0)),
            pl.BlockSpec((1, WCout), lambda i: (0, 0)),
        ],
        out_specs=pl.BlockSpec((BH, WCout), lambda i: (i, 0)),
        compiler_params=pltpu.CompilerParams(
            dimension_semantics=("parallel",)),
    )(x_flat, w1b, b1r, w2b, b2r)

    # (NB*H, W*Cout) -> drop batch padding -> NCHW
    out = out_flat[: N * H].reshape(N, H, W, Cout)
    return jnp.transpose(out, (0, 3, 1, 2))


def _reference_forward(x_nchw, w1_hwio, b1, w2_hwio, b2):
    """Pure-JAX reference (matches PyTorch Conv2d(3, padding=1) semantics)."""
    dn = ("NCHW", "HWIO", "NCHW")
    hp = jax.lax.Precision.HIGHEST
    y = jax.lax.conv_general_dilated(x_nchw, w1_hwio, (1, 1), [(1, 1), (1, 1)],
                                     dimension_numbers=dn, precision=hp)
    y = jnp.maximum(y + b1[None, :, None, None], 0.0)
    y = jax.lax.conv_general_dilated(y, w2_hwio, (1, 1), [(1, 1), (1, 1)],
                                     dimension_numbers=dn, precision=hp)
    return y + b2[None, :, None, None]


if __name__ == "__main__":
    # Small shapes consistent with the module: N=2, Cin=4, Cout=8, spatial 16x16.
    N, Cin, Cout, H, W = 2, 4, 8, 16, 16

    key = jax.random.PRNGKey(0)
    kx, k1, k2, k3, k4 = jax.random.split(key, 5)

    x = jax.random.normal(kx, (N, Cin, H, W), dtype=jnp.float32)
    # deterministic "kaiming-ish" init for the two conv layers (HWIO layout)
    w1 = jax.random.normal(k1, (3, 3, Cin, Cout), dtype=jnp.float32) * (1.0 / np.sqrt(9 * Cin))
    b1 = jax.random.normal(k2, (Cout,), dtype=jnp.float32) * 0.1
    w2 = jax.random.normal(k3, (3, 3, Cout, Cout), dtype=jnp.float32) * (1.0 / np.sqrt(9 * Cout))
    b2 = jax.random.normal(k4, (Cout,), dtype=jnp.float32) * 0.1

    fwd = jax.jit(edge_compact_forward)
    out = jax.block_until_ready(fwd(x, w1, b1, w2, b2))

    ref = jax.block_until_ready(_reference_forward(x, w1, b1, w2, b2))
    assert out.shape == (N, Cout, H, W)
    np.testing.assert_allclose(np.asarray(out), np.asarray(ref), atol=1e-4, rtol=1e-4)

    print("KERNEL_OK")
</pallas_src>

<mosaic_0001>
module attributes {stable_mosaic.version = 11 : i64} {
  func.func @_edge_compact_kernel(%arg0: i32, %arg1: memref<32x192xf32, #tpu.memory_space<vmem>>, %arg2: memref<192x128xf32, #tpu.memory_space<vmem>>, %arg3: memref<1x128xf32, #tpu.memory_space<vmem>>, %arg4: memref<384x128xf32, #tpu.memory_space<vmem>>, %arg5: memref<1x128xf32, #tpu.memory_space<vmem>>, %arg6: memref<32x128xf32, #tpu.memory_space<vmem>>) attributes {dimension_semantics = [#tpu.dimension_semantics<parallel>], iteration_bounds = array<i64: 1>, scalar_prefetch = 0 : i64, scratch_operands = 0 : i64, tpu.core_type = #tpu.core_type<tc>, window_params = [{transform_indices = @transform_0, window_bounds = array<i64: 32, 192>}, {pipeline_mode = #tpu.pipeline_mode<synchronous>, transform_indices = @transform_1, window_bounds = array<i64: 192, 128>}, {pipeline_mode = #tpu.pipeline_mode<synchronous>, transform_indices = @transform_2, window_bounds = array<i64: 1, 128>}, {pipeline_mode = #tpu.pipeline_mode<synchronous>, transform_indices = @transform_3, window_bounds = array<i64: 384, 128>}, {pipeline_mode = #tpu.pipeline_mode<synchronous>, transform_indices = @transform_4, window_bounds = array<i64: 1, 128>}, {transform_indices = @transform_5, window_bounds = array<i64: 32, 128>}]} {
    %c0 = arith.constant 0 : index
    %c0_0 = arith.constant 0 : index
    %0 = vector.load %arg1[%c0, %c0_0] : memref<32x192xf32, #tpu.memory_space<vmem>>, vector<32x192xf32>
    %c0_1 = arith.constant 0 : index
    %c0_2 = arith.constant 0 : index
    %1 = vector.load %arg2[%c0_1, %c0_2] : memref<192x128xf32, #tpu.memory_space<vmem>>, vector<192x128xf32>
    %cst = arith.constant dense<0.000000e+00> : vector<32x128xf32>
    %2 = tpu.matmul %0, %1, %cst {dimension_numbers = #tpu.dot_dimension_numbers<[1], [0], [0], [1], [0, 0, 1, 1], [], []>} : vector<32x192xf32>, vector<192x128xf32>, vector<32x128xf32> -> vector<32x128xf32>
    %c0_3 = arith.constant 0 : index
    %c0_4 = arith.constant 0 : index
    %3 = vector.load %arg3[%c0_3, %c0_4] : memref<1x128xf32, #tpu.memory_space<vmem>>, vector<1x128xf32>
    %4 = vector.broadcast %3 : vector<1x128xf32> to vector<32x128xf32>
    %5 = arith.addf %2, %4 : vector<32x128xf32>
    %cst_5 = arith.constant 0.000000e+00 : f32
    %6 = vector.broadcast %cst_5 : f32 to vector<32x128xf32>
    %7 = arith.maximumf %5, %6 : vector<32x128xf32>
    %8 = vector.shape_cast %7 : vector<32x128xf32> to vector<2x16x128xf32>
    %cst_6 = arith.constant 0.000000e+00 : f32
    %9 = vector.broadcast %cst_6 : f32 to vector<2x8x128xf32>
    %10 = tpu.concatenate %9, %8, %9 in 1 : vector<2x8x128xf32>, vector<2x16x128xf32>, vector<2x8x128xf32> -> vector<2x32x128xf32>
    %11 = vector.extract_strided_slice %10 {offsets = [0, 7, 0], sizes = [2, 16, 128], strides = [1, 1, 1]} : vector<2x32x128xf32> to vector<2x16x128xf32>
    %12 = vector.extract_strided_slice %10 {offsets = [0, 9, 0], sizes = [2, 16, 128], strides = [1, 1, 1]} : vector<2x32x128xf32> to vector<2x16x128xf32>
    %13 = tpu.concatenate %11, %8, %12 in 2 : vector<2x16x128xf32>, vector<2x16x128xf32>, vector<2x16x128xf32> -> vector<2x16x384xf32>
    %14 = vector.shape_cast %13 : vector<2x16x384xf32> to vector<32x384xf32>
    %c0_7 = arith.constant 0 : index
    %c0_8 = arith.constant 0 : index
    %15 = vector.load %arg4[%c0_7, %c0_8] : memref<384x128xf32, #tpu.memory_space<vmem>>, vector<384x128xf32>
    %cst_9 = arith.constant dense<0.000000e+00> : vector<32x128xf32>
    %16 = tpu.matmul %14, %15, %cst_9 {dimension_numbers = #tpu.dot_dimension_numbers<[1], [0], [0], [1], [0, 0, 1, 1], [], []>} : vector<32x384xf32>, vector<384x128xf32>, vector<32x128xf32> -> vector<32x128xf32>
    %c0_10 = arith.constant 0 : index
    %c0_11 = arith.constant 0 : index
    %17 = vector.load %arg5[%c0_10, %c0_11] : memref<1x128xf32, #tpu.memory_space<vmem>>, vector<1x128xf32>
    %18 = vector.broadcast %17 : vector<1x128xf32> to vector<32x128xf32>
    %19 = arith.addf %16, %18 : vector<32x128xf32>
    %c0_12 = arith.constant 0 : index
    %c0_13 = arith.constant 0 : index
    %20 = vector.load %arg6[%c0_12, %c0_13] : memref<32x128xf32, #tpu.memory_space<vmem>>, vector<32x128xf32>
    tpu.vector_store %arg6[%c0_12, %c0_13], %19 {strides = array<i32>} : memref<32x128xf32, #tpu.memory_space<vmem>>, vector<32x128xf32>,
    return
  }
  func.func @transform_0(%arg0: i32) -> (i32, i32) {
    %c0_i32 = arith.constant 0 : i32
    %c0_i32_0 = arith.constant 0 : i32
    return %arg0, %c0_i32 : i32, i32
  }
  func.func @transform_1(%arg0: i32) -> (i32, i32) {
    %c0_i32 = arith.constant 0 : i32
    %c0_i32_0 = arith.constant 0 : i32
    %c0_i32_1 = arith.constant 0 : i32
    return %c0_i32, %c0_i32_0 : i32, i32
  }
  func.func @transform_2(%arg0: i32) -> (i32, i32) {
    %c0_i32 = arith.constant 0 : i32
    %c0_i32_0 = arith.constant 0 : i32
    %c0_i32_1 = arith.constant 0 : i32
    return %c0_i32, %c0_i32_0 : i32, i32
  }
  func.func @transform_3(%arg0: i32) -> (i32, i32) {
    %c0_i32 = arith.constant 0 : i32
    %c0_i32_0 = arith.constant 0 : i32
    %c0_i32_1 = arith.constant 0 : i32
    return %c0_i32, %c0_i32_0 : i32, i32
  }
  func.func @transform_4(%arg0: i32) -> (i32, i32) {
    %c0_i32 = arith.constant 0 : i32
    %c0_i32_0 = arith.constant 0 : i32
    %c0_i32_1 = arith.constant 0 : i32
    return %c0_i32, %c0_i32_0 : i32, i32
  }
  func.func @transform_5(%arg0: i32) -> (i32, i32) {
    %c0_i32 = arith.constant 0 : i32
    %c0_i32_0 = arith.constant 0 : i32
    return %arg0, %c0_i32 : i32, i32
  }
}

</mosaic_0001>

<llo_original>
// kernel: tile.13
$region0: #{tile.13}
  #allocation0 [shape = 's32[1]{0}', space=sflag, size = 0x4, scoped, tag = 'scoped memory for tile.13']
  %s0 = inlined_call_operand.vmem [shape: f32[8], index: 0, kind: input, shape index: {}]
  %s1 = inlined_call_operand.vmem [shape: f32[16,8], index: 1, kind: output, shape index: {}]
  // Predicated region
  $region2: #{tile.13} parent=0 // pred_check
    _
  $region3: #{tile.13} parent=0 // pred_check_branch
    %3 = sbr.rel (0) target = $region5
  $region4: #{tile.13} parent=0 // pred_region
    _
  $region5: #{tile.13} parent=0 // pred_fallthru
    _
  %v4 = vld [vmem:[%s0] ss:$0 sm:$0xff]
  %5 = vst [vmem:[%s1] sm:$0xff] %v4
  %s6 = scalar_lea.vmem %s1, 8
  %7 = vst [vmem:[%s6] sm:$0xff] %v4

// kernel: tile.14
$region0: #{tile.14}
  %s0 = inlined_call_operand.vmem [shape: f32[16,8], index: 0, kind: input, shape index: {}]
  %s1 = inlined_call_operand.vmem [shape: f32[1,128], index: 1, kind: output, shape index: {}]
  $region1: #{tile.14} parent=0
    #allocation0 [shape = 'u8[4096]{0}', space=vmem, size = 0x1000, scoped, tag = 'scoped mem for output reshape']
    %v2 = vld [vmem:[%s0] sm:$0x1]
    %vm3 = vcmask 64512
    %4 = vst.msk [vmem:[#allocation0] sm:$0x1] %vm3, %v2
    %s5 = scalar_lea.vmem %s0, 15
    %v6 = vld [vmem:[%s5] sm:$0x1]
    %7 = vrot.lane.b32.xlu0 %v6, 120
    %v8 = vpop.permute.xlu0 %7
    %vm9 = vcmask 1048512
    %10 = vst.msk [vmem:[#allocation0] sm:$0x1] %vm9, %v8
    %s11 = scalar_lea.vmem %s0, 14
    %v12 = vld [vmem:[%s11] sm:$0x1]
    %13 = vrot.lane.b32.xlu0 %v12, 112
    %v14 = vpop.permute.xlu0 %13
    %vm15 = vcmask 982912
    %16 = vst.msk [vmem:[#allocation0] sm:$0x1] %vm15, %v14
    %s17 = scalar_lea.vmem %s0, 13
    %v18 = vld [vmem:[%s17] sm:$0x1]
    %19 = vrot.lane.b32.xlu0 %v18, 104
    %v20 = vpop.permute.xlu0 %19
    %vm21 = vcmask 917312
    %22 = vst.msk [vmem:[#allocation0] sm:$0x1] %vm21, %v20
    %s23 = scalar_lea.vmem %s0, 12
    %v24 = vld [vmem:[%s23] sm:$0x1]
    %25 = vrot.lane.b32.xlu0 %v24, 96
    %v26 = vpop.permute.xlu0 %25
    %vm27 = vcmask 851712
    %28 = vst.msk [vmem:[#allocation0] sm:$0x1] %vm27, %v26
    %s29 = scalar_lea.vmem %s0, 11
    %v30 = vld [vmem:[%s29] sm:$0x1]
    %31 = vrot.lane.b32.xlu0 %v30, 88
    %v32 = vpop.permute.xlu0 %31
    %vm33 = vcmask 786112
    %34 = vst.msk [vmem:[#allocation0] sm:$0x1] %vm33, %v32
    %s35 = scalar_lea.vmem %s0, 10
    %v36 = vld [vmem:[%s35] sm:$0x1]
    %37 = vrot.lane.b32.xlu0 %v36, 80
    %v38 = vpop.permute.xlu0 %37
    %vm39 = vcmask 720512
    %40 = vst.msk [vmem:[#allocation0] sm:$0x1] %vm39, %v38
    %s41 = scalar_lea.vmem %s0, 9
    %v42 = vld [vmem:[%s41] sm:$0x1]
    %43 = vrot.lane.b32.xlu0 %v42, 72
    %v44 = vpop.permute.xlu0 %43
    %vm45 = vcmask 654912
    %46 = vst.msk [vmem:[#allocation0] sm:$0x1] %vm45, %v44
    %s47 = scalar_lea.vmem %s0, 8
    %v48 = vld [vmem:[%s47] sm:$0x1]
    %49 = vrot.lane.b32.xlu0 %v48, 64
    %v50 = vpop.permute.xlu0 %49
    %vm51 = vcmask 589312
    %52 = vst.msk [vmem:[#allocation0] sm:$0x1] %vm51, %v50
    %s53 = scalar_lea.vmem %s0, 7
    %v54 = vld [vmem:[%s53] sm:$0x1]
    %55 = vrot.lane.b32.xlu0 %v54, 56
    %v56 = vpop.permute.xlu0 %55
    %vm57 = vcmask 523712
    %58 = vst.msk [vmem:[#allocation0] sm:$0x1] %vm57, %v56
    %s59 = scalar_lea.vmem %s0, 6
    %v60 = vld [vmem:[%s59] sm:$0x1]
    %61 = vrot.lane.b32.xlu0 %v60, 48
    %v62 = vpop.permute.xlu0 %61
    %vm63 = vcmask 458112
    %64 = vst.msk [vmem:[#allocation0] sm:$0x1] %vm63, %v62
    %s65 = scalar_lea.vmem %s0, 5
    %v66 = vld [vmem:[%s65] sm:$0x1]
    %67 = vrot.lane.b32.xlu0 %v66, 40
    %v68 = vpop.permute.xlu0 %67
    %vm69 = vcmask 392512
    %70 = vst.msk [vmem:[#allocation0] sm:$0x1] %vm69, %v68
    %s71 = scalar_lea.vmem %s0, 4
    %v72 = vld [vmem:[%s71] sm:$0x1]
    %73 = vrot.lane.b32.xlu0 %v72, 32
    %v74 = vpop.permute.xlu0 %73
    %vm75 = vcmask 326912
    %76 = vst.msk [vmem:[#allocation0] sm:$0x1] %vm75, %v74
    %s77 = scalar_lea.vmem %s0, 3
    %v78 = vld [vmem:[%s77] sm:$0x1]
    %79 = vrot.lane.b32.xlu0 %v78, 24
    %v80 = vpop.permute.xlu0 %79
    %vm81 = vcmask 261312
    %82 = vst.msk [vmem:[#allocation0] sm:$0x1] %vm81, %v80
    %s83 = scalar_lea.vmem %s0, 2
    %v84 = vld [vmem:[%s83] sm:$0x1]
    %85 = vrot.lane.b32.xlu0 %v84, 16
    %v86 = vpop.permute.xlu0 %85
    %vm87 = vcmask 195712
    %88 = vst.msk [vmem:[#allocation0] sm:$0x1] %vm87, %v86
    %s89 = scalar_lea.vmem %s0, 1
    %v90 = vld [vmem:[%s89] sm:$0x1]
    %91 = vrot.lane.b32.xlu0 %v90, 8
    %v92 = vpop.permute.xlu0 %91
    %vm93 = vcmask 130112
    %94 = vst.msk [vmem:[#allocation0] sm:$0x1] %vm93, %v92
    %s96 = ssub.s32 2, 1
    %v97 = vld [vmem:[#allocation0] sm:%s96]
    %s99 = ssub.s32 2, 1
    %100 = vst [vmem:[%s1] sm:%s99] %v97

// kernel: edge_compact_forward.1
$region0: #{edge_compact_forward.1}
  #allocation0 [shape = 'u32[]', space=smem, size = 0x4, offset = 0x4, fixed_abs, tag = 'smem constant byte address 0x4 - core index']
  #allocation1 [shape = 'u32[72,128]{1,0:T(1,128)}', space=vmem, size = 0x9000, scoped, tag = 'internal scratch']
  %s0 = inlined_call_operand.vmem [shape: f32[32,192], index: 0, kind: input, shape index: {}]
  %s1 = inlined_call_operand.vmem [shape: f32[192,128], index: 1, kind: input, shape index: {}]
  %s2 = inlined_call_operand.vmem [shape: f32[1,128], index: 2, kind: input, shape index: {}]
  %s3 = inlined_call_operand.vmem [shape: f32[384,128], index: 3, kind: input, shape index: {}]
  %s4 = inlined_call_operand.vmem [shape: f32[1,128], index: 4, kind: input, shape index: {}]
  %s5 = inlined_call_operand.vmem [shape: f32[32,128], index: 5, kind: output, shape index: {}]
  %s6 = sld [smem:[#allocation0]]
  $region30: #{edge_compact_forward.1} parent=0
    _
  %s8 = ssub.s32 1, %s6
  %s9 = scalar_select 0, %s8, %s6
  // Predicated region
  $region2: #{edge_compact_forward.1} parent=0 // pred_check
    _
  $region3: #{edge_compact_forward.1} parent=0 // pred_check_branch
    %11 = sbr.rel (0) target = $region5
  $region4: #{edge_compact_forward.1} parent=0 // pred_region
    _
  $region5: #{edge_compact_forward.1} parent=0 // pred_fallthru
    _
  // Predicated region
  $region6: #{edge_compact_forward.1} parent=0 // pred_check
    _
  $region7: #{edge_compact_forward.1} parent=0 // pred_check_branch
    %13 = sbr.rel (0) target = $region9
  $region8: #{edge_compact_forward.1} parent=0 // pred_region
    _
  $region9: #{edge_compact_forward.1} parent=0 // pred_fallthru
    _
  // Predicated region
  $region10: #{edge_compact_forward.1} parent=0 // pred_check
    _
  $region11: #{edge_compact_forward.1} parent=0 // pred_check_branch
    %15 = sbr.rel (0) target = $region13
  $region12: #{edge_compact_forward.1} parent=0 // pred_region
    _
  $region13: #{edge_compact_forward.1} parent=0 // pred_fallthru
    _
  // Predicated region
  $region14: #{edge_compact_forward.1} parent=0 // pred_check
    _
  $region15: #{edge_compact_forward.1} parent=0 // pred_check_branch
    %17 = sbr.rel (0) target = $region17
  $region16: #{edge_compact_forward.1} parent=0 // pred_region
    _
  $region17: #{edge_compact_forward.1} parent=0 // pred_fallthru
    _
  // Predicated region
  $region18: #{edge_compact_forward.1} parent=0 // pred_check
    _
  $region19: #{edge_compact_forward.1} parent=0 // pred_check_branch
    %19 = sbr.rel (0) target = $region21
  $region20: #{edge_compact_forward.1} parent=0 // pred_region
    _
  $region21: #{edge_compact_forward.1} parent=0 // pred_fallthru
    _
  %v20 = vld [vmem:[%s0] sm:$0xff]
  %v21 = vld [vmem:[%s0 + $0x8] sm:$0xff]
  %v22 = vld [vmem:[%s0 + $0x10] sm:$0xff]
  %v23 = vld [vmem:[%s0 + $0x18] sm:$0xff]
  %v24 = vld [vmem:[%s0 + $0x20] sm:$0xff]
  %v25 = vld [vmem:[%s0 + $0x28] sm:$0xff]
  %v26 = vld [vmem:[%s0 + $0x30] sm:$0xff]
  %v27 = vld [vmem:[%s0 + $0x38] sm:$0xff]
  %v28 = vld [vmem:[%s1] sm:$0xff]
  %v29 = vld [vmem:[%s1 + $0x8] sm:$0xff]
  %v30 = vld [vmem:[%s1 + $0x10] sm:$0xff]
  %v31 = vld [vmem:[%s1 + $0x18] sm:$0xff]
  %v32 = vld [vmem:[%s1 + $0x20] sm:$0xff]
  %v33 = vld [vmem:[%s1 + $0x28] sm:$0xff]
  %v34 = vld [vmem:[%s1 + $0x30] sm:$0xff]
  %v35 = vld [vmem:[%s1 + $0x38] sm:$0xff]
  %v36 = vld [vmem:[%s1 + $0x40] sm:$0xff]
  %v37 = vld [vmem:[%s1 + $0x48] sm:$0xff]
  %v38 = vld [vmem:[%s1 + $0x50] sm:$0xff]
  %v39 = vld [vmem:[%s1 + $0x58] sm:$0xff]
  %v40 = vld [vmem:[%s1 + $0x60] sm:$0xff]
  %v41 = vld [vmem:[%s1 + $0x68] sm:$0xff]
  %v42 = vld [vmem:[%s1 + $0x70] sm:$0xff]
  %v43 = vld [vmem:[%s1 + $0x78] sm:$0xff]
  %v44 = vld [vmem:[%s1 + $0x80] sm:$0xff]
  %v45 = vld [vmem:[%s1 + $0x88] sm:$0xff]
  %v46 = vld [vmem:[%s1 + $0x90] sm:$0xff]
  %v47 = vld [vmem:[%s1 + $0x98] sm:$0xff]
  %v48 = vld [vmem:[%s1 + $0xa0] sm:$0xff]
  %v49 = vld [vmem:[%s1 + $0xa8] sm:$0xff]
  %v50 = vld [vmem:[%s1 + $0xb0] sm:$0xff]
  %v51 = vld [vmem:[%s1 + $0xb8] sm:$0xff]
  %v52 = vld [vmem:[%s2] sm:$0x1]
  %v54 = vperm.slane %v52, 0
  %vm56 = vcmask 523264
  %v58 = vsel %vm56, %v21, 0
  %v61 = vsel %vm56, %v23, 0
  %v64 = vsel %vm56, %v25, 0
  %v67 = vsel %vm56, %v27, 0
  %69 = vmatpush.msra.mxu0 %v43
  %70 = vmatpush.msra.mxu0 %v42
  %71 = vmatpush.msra.mxu0 %v41
  %72 = vmatpush.msra.mxu0 %v40
  %73 = vmatpush.msra.mxu0 %v39
  %74 = vmatpush.msra.mxu0 %v38
  %75 = vmatpush.msra.mxu0 %v37
  %76 = vmatpush.msra.mxu0 %v36
  %77 = vmatpush.msra.mxu0 %v35
  %78 = vmatpush.msra.mxu0 %v34
  %79 = vmatpush.msra.mxu0 %v33
  %80 = vmatpush.msra.mxu0 %v32
  %81 = vmatpush.msra.mxu0 %v31
  %82 = vmatpush.msra.mxu0 %v30
  %83 = vmatpush.msra.mxu0 %v29
  %84 = vmatpush.msra.mxu0 %v28
  %85 = vmatmul.f32.gmra.mxu0 %v20
  %v86 = vpop.f32.mrf.mxu0
  %v87 = vadd.f32 %v54, %v86
  %88 = vmatmul.f32.gmra.mxu0 %v22
  %v89 = vpop.f32.mrf.mxu0
  %v90 = vadd.f32 %v54, %v89
  %91 = vmatmul.f32.gmra.mxu0 %v24
  %v92 = vpop.f32.mrf.mxu0
  %v93 = vadd.f32 %v54, %v92
  %94 = vmatmul.f32.gmra.mxu0 %v26
  %v95 = vpop.f32.mrf.mxu0
  %v96 = vadd.f32 %v54, %v95
  %97 = vdwg.mxu0
  %98 = vmatpush.msra.mxu0 0.0
  %99 = vmatpush.msra.mxu0 0.0
  %100 = vmatpush.msra.mxu0 0.0
  %101 = vmatpush.msra.mxu0 0.0
  %102 = vmatpush.msra.mxu0 0.0
  %103 = vmatpush.msra.mxu0 0.0
  %104 = vmatpush.msra.mxu0 0.0
  %105 = vmatpush.msra.mxu0 0.0
  %106 = vmatpush.msra.mxu0 %v51
  %107 = vmatpush.msra.mxu0 %v50
  %108 = vmatpush.msra.mxu0 %v49
  %109 = vmatpush.msra.mxu0 %v48
  %110 = vmatpush.msra.mxu0 %v47
  %111 = vmatpush.msra.mxu0 %v46
  %112 = vmatpush.msra.mxu0 %v45
  %113 = vmatpush.msra.mxu0 %v44
  %114 = vmatmul.f32.gmra.mxu0 %v58
  %v115 = vpop.f32.mrf.mxu0
  %v116 = vadd.f32 %v87, %v115
  %117 = vmatmul.f32.gmra.mxu0 %v61
  %v118 = vpop.f32.mrf.mxu0
  %v119 = vadd.f32 %v90, %v118
  %120 = vmatmul.f32.gmra.mxu0 %v64
  %v121 = vpop.f32.mrf.mxu0
  %v122 = vadd.f32 %v93, %v121
  %123 = vmatmul.f32.gmra.mxu0 %v67
  %v124 = vpop.f32.mrf.mxu0
  %v125 = vadd.f32 %v96, %v124
  %126 = vdwg.mxu0
  %v127 = vmax.f32 %v116, 0.0
  %v128 = vmax.f32 %v119, 0.0
  %v129 = vmax.f32 %v122, 0.0
  %v130 = vmax.f32 %v125, 0.0
  %vm135 = vcmask 1046528
  %v136 = vrot.slane %v127, 1
  %v137 = vrot.slane %v128, 1
  %v138 = vsel %vm135, %v136, %v137
  %v139 = vrot.slane %v129, 1
  %v140 = vrot.slane %v130, 1
  %v141 = vsel %vm135, %v139, %v140
  %vm143 = vcmask 1045504
  %v144 = vrot.slane %v127, 2
  %v145 = vrot.slane %v128, 2
  %v146 = vsel %vm143, %v144, %v145
  %v147 = vrot.slane 0.0, 2
  %v148 = vsel %vm143, %v145, %v147
  %v149 = vrot.slane %v129, 2
  %v150 = vrot.slane %v130, 2
  %v151 = vsel %vm143, %v149, %v150
  %v152 = vsel %vm143, %v150, %v147
  %vm153 = vcmask 1040384
  %v154 = vrot.slane 0.0, 7
  %v155 = vrot.slane %v127, 7
  %v156 = vsel %vm153, %v154, %v155
  %v157 = vrot.slane %v136, 7
  %v158 = vrot.slane %v138, 7
  %v159 = vsel %vm153, %v157, %v158
  %v160 = vrot.slane %v144, 7
  %v161 = vrot.slane %v146, 7
  %v162 = vsel %vm153, %v160, %v161
  %v163 = vrot.slane %v128, 7
  %v164 = vsel %vm153, %v155, %v163
  %v165 = vrot.slane %v137, 7
  %v166 = vsel %vm153, %v158, %v165
  %v167 = vrot.slane %v148, 7
  %v168 = vsel %vm153, %v161, %v167
  %v169 = vrot.slane %v129, 7
  %v170 = vsel %vm153, %v154, %v169
  %v171 = vrot.slane %v139, 7
  %v172 = vrot.slane %v141, 7
  %v173 = vsel %vm153, %v171, %v172
  %v174 = vrot.slane %v149, 7
  %v175 = vrot.slane %v151, 7
  %v176 = vsel %vm153, %v174, %v175
  %v177 = vrot.slane %v130, 7
  %v178 = vsel %vm153, %v169, %v177
  %v179 = vrot.slane %v140, 7
  %v180 = vsel %vm153, %v172, %v179
  %v181 = vrot.slane %v152, 7
  %v182 = vsel %vm153, %v175, %v181
  %v195 = vld [vmem:[%s3] sm:$0xff]
  %v196 = vld [vmem:[%s3 + $0x8] sm:$0xff]
  %v197 = vld [vmem:[%s3 + $0x10] sm:$0xff]
  %v198 = vld [vmem:[%s3 + $0x18] sm:$0xff]
  %v199 = vld [vmem:[%s3 + $0x20] sm:$0xff]
  %v200 = vld [vmem:[%s3 + $0x28] sm:$0xff]
  %v201 = vld [vmem:[%s3 + $0x30] sm:$0xff]
  %v202 = vld [vmem:[%s3 + $0x38] sm:$0xff]
  %v203 = vld [vmem:[%s3 + $0x40] sm:$0xff]
  %v204 = vld [vmem:[%s3 + $0x48] sm:$0xff]
  %v205 = vld [vmem:[%s3 + $0x50] sm:$0xff]
  %v206 = vld [vmem:[%s3 + $0x58] sm:$0xff]
  %v207 = vld [vmem:[%s3 + $0x60] sm:$0xff]
  %v208 = vld [vmem:[%s3 + $0x68] sm:$0xff]
  %v209 = vld [vmem:[%s3 + $0x70] sm:$0xff]
  %v210 = vld [vmem:[%s3 + $0x78] sm:$0xff]
  %v211 = vld [vmem:[%s3 + $0x80] sm:$0xff]
  %v212 = vld [vmem:[%s3 + $0x88] sm:$0xff]
  %v213 = vld [vmem:[%s3 + $0x90] sm:$0xff]
  %v214 = vld [vmem:[%s3 + $0x98] sm:$0xff]
  %v215 = vld [vmem:[%s3 + $0xa0] sm:$0xff]
  %v216 = vld [vmem:[%s3 + $0xa8] sm:$0xff]
  %v217 = vld [vmem:[%s3 + $0xb0] sm:$0xff]
  %v218 = vld [vmem:[%s3 + $0xb8] sm:$0xff]
  %v219 = vld [vmem:[%s3 + $0xc0] sm:$0xff]
  %v220 = vld [vmem:[%s3 + $0xc8] sm:$0xff]
  %v221 = vld [vmem:[%s3 + $0xd0] sm:$0xff]
  %v222 = vld [vmem:[%s3 + $0xd8] sm:$0xff]
  %v223 = vld [vmem:[%s3 + $0xe0] sm:$0xff]
  %v224 = vld [vmem:[%s3 + $0xe8] sm:$0xff]
  %v225 = vld [vmem:[%s3 + $0xf0] sm:$0xff]
  %v226 = vld [vmem:[%s3 + $0xf8] sm:$0xff]
  %v227 = vld [vmem:[%s3 + $0x100] sm:$0xff]
  %v228 = vld [vmem:[%s3 + $0x108] sm:$0xff]
  %v229 = vld [vmem:[%s3 + $0x110] sm:$0xff]
  %v230 = vld [vmem:[%s3 + $0x118] sm:$0xff]
  %v231 = vld [vmem:[%s3 + $0x120] sm:$0xff]
  %v232 = vld [vmem:[%s3 + $0x128] sm:$0xff]
  %v233 = vld [vmem:[%s3 + $0x130] sm:$0xff]
  %v234 = vld [vmem:[%s3 + $0x138] sm:$0xff]
  %v235 = vld [vmem:[%s3 + $0x140] sm:$0xff]
  %v236 = vld [vmem:[%s3 + $0x148] sm:$0xff]
  %v237 = vld [vmem:[%s3 + $0x150] sm:$0xff]
  %v238 = vld [vmem:[%s3 + $0x158] sm:$0xff]
  %v239 = vld [vmem:[%s3 + $0x160] sm:$0xff]
  %v240 = vld [vmem:[%s3 + $0x168] sm:$0xff]
  %v241 = vld [vmem:[%s3 + $0x170] sm:$0xff]
  %v242 = vld [vmem:[%s3 + $0x178] sm:$0xff]
  %v243 = vld [vmem:[%s4] sm:$0x1]
  %v245 = vperm.slane %v243, 0
  %247 = vmatpush.msra.mxu0 %v210
  %248 = vmatpush.msra.mxu0 %v209
  %249 = vmatpush.msra.mxu0 %v208
  %250 = vmatpush.msra.mxu0 %v207
  %251 = vmatpush.msra.mxu0 %v206
  %252 = vmatpush.msra.mxu0 %v205
  %253 = vmatpush.msra.mxu0 %v204
  %254 = vmatpush.msra.mxu0 %v203
  %255 = vmatpush.msra.mxu0 %v202
  %256 = vmatpush.msra.mxu0 %v201
  %257 = vmatpush.msra.mxu0 %v200
  %258 = vmatpush.msra.mxu0 %v199
  %259 = vmatpush.msra.mxu0 %v198
  %260 = vmatpush.msra.mxu0 %v197
  %261 = vmatpush.msra.mxu0 %v196
  %262 = vmatpush.msra.mxu0 %v195
  %263 = vmatmul.f32.gmra.mxu0 %v156
  %v264 = vpop.f32.mrf.mxu0
  %v265 = vadd.f32 %v245, %v264
  %266 = vmatmul.f32.gmra.mxu0 %v164
  %v267 = vpop.f32.mrf.mxu0
  %v268 = vadd.f32 %v245, %v267
  %269 = vmatmul.f32.gmra.mxu0 %v170
  %v270 = vpop.f32.mrf.mxu0
  %v271 = vadd.f32 %v245, %v270
  %272 = vmatmul.f32.gmra.mxu0 %v178
  %v273 = vpop.f32.mrf.mxu0
  %v274 = vadd.f32 %v245, %v273
  %275 = vdwg.mxu0
  %276 = vmatpush.msra.mxu0 %v226
  %277 = vmatpush.msra.mxu0 %v225
  %278 = vmatpush.msra.mxu0 %v224
  %279 = vmatpush.msra.mxu0 %v223
  %280 = vmatpush.msra.mxu0 %v222
  %281 = vmatpush.msra.mxu0 %v221
  %282 = vmatpush.msra.mxu0 %v220
  %283 = vmatpush.msra.mxu0 %v219
  %284 = vmatpush.msra.mxu0 %v218
  %285 = vmatpush.msra.mxu0 %v217
  %286 = vmatpush.msra.mxu0 %v216
  %287 = vmatpush.msra.mxu0 %v215
  %288 = vmatpush.msra.mxu0 %v214
  %289 = vmatpush.msra.mxu0 %v213
  %290 = vmatpush.msra.mxu0 %v212
  %291 = vmatpush.msra.mxu0 %v211
  %292 = vmatmul.f32.gmra.mxu0 %v159
  %v293 = vpop.f32.mrf.mxu0
  %v294 = vadd.f32 %v265, %v293
  %295 = vmatmul.f32.gmra.mxu0 %v166
  %v296 = vpop.f32.mrf.mxu0
  %v297 = vadd.f32 %v268, %v296
  %298 = vmatmul.f32.gmra.mxu0 %v173
  %v299 = vpop.f32.mrf.mxu0
  %v300 = vadd.f32 %v271, %v299
  %301 = vmatmul.f32.gmra.mxu0 %v180
  %v302 = vpop.f32.mrf.mxu0
  %v303 = vadd.f32 %v274, %v302
  %304 = vdwg.mxu0
  %305 = vmatpush.msra.mxu0 %v242
  %306 = vmatpush.msra.mxu0 %v241
  %307 = vmatpush.msra.mxu0 %v240
  %308 = vmatpush.msra.mxu0 %v239
  %309 = vmatpush.msra.mxu0 %v238
  %310 = vmatpush.msra.mxu0 %v237
  %311 = vmatpush.msra.mxu0 %v236
  %312 = vmatpush.msra.mxu0 %v235
  %313 = vmatpush.msra.mxu0 %v234
  %314 = vmatpush.msra.mxu0 %v233
  %315 = vmatpush.msra.mxu0 %v232
  %316 = vmatpush.msra.mxu0 %v231
  %317 = vmatpush.msra.mxu0 %v230
  %318 = vmatpush.msra.mxu0 %v229
  %319 = vmatpush.msra.mxu0 %v228
  %320 = vmatpush.msra.mxu0 %v227
  %321 = vmatmul.f32.gmra.mxu0 %v162
  %v322 = vpop.f32.mrf.mxu0
  %v323 = vadd.f32 %v294, %v322
  %324 = vmatmul.f32.gmra.mxu0 %v168
  %v325 = vpop.f32.mrf.mxu0
  %v326 = vadd.f32 %v297, %v325
  %327 = vmatmul.f32.gmra.mxu0 %v176
  %v328 = vpop.f32.mrf.mxu0
  %v329 = vadd.f32 %v300, %v328
  %330 = vmatmul.f32.gmra.mxu0 %v182
  %v331 = vpop.f32.mrf.mxu0
  %v332 = vadd.f32 %v303, %v331
  %333 = vdwg.mxu0
  %334 = vst [vmem:[%s5] sm:$0xff] %v323
  %335 = vst [vmem:[%s5 + $0x8] sm:$0xff] %v326
  %336 = vst [vmem:[%s5 + $0x10] sm:$0xff] %v329
  %337 = vst [vmem:[%s5 + $0x18] sm:$0xff] %v332
  // Predicated region
  $region22: #{edge_compact_forward.1} parent=0 // pred_check
    _
  $region23: #{edge_compact_forward.1} parent=0 // pred_check_branch
    %339 = sbr.rel (0) target = $region25
  $region24: #{edge_compact_forward.1} parent=0 // pred_region
    _
  $region25: #{edge_compact_forward.1} parent=0 // pred_fallthru
    _
  // Predicated region
  $region26: #{edge_compact_forward.1} parent=0 // pred_check
    _
  $region27: #{edge_compact_forward.1} parent=0 // pred_check_branch
    %341 = sbr.rel (0) target = $region29
  $region28: #{edge_compact_forward.1} parent=0 // pred_region
    _
  $region29: #{edge_compact_forward.1} parent=0 // pred_fallthru
    _

</llo_original>
